<compile_context>
chip_gen: v7x
topology: tpu7x:2x2x1
jax: 0.10.0
libtpu: 0.0.40
codegen_flags: <defaults>
</compile_context>

<pallas_src>
import math

import jax
import jax.numpy as jnp
from jax.experimental import pallas as pl
from jax.experimental.pallas import tpu as pltpu

_LANE = 128


def _round_up(n, m):
    return (n + m - 1) // m * m


def _copy_lstm_cell_kernel(xh_ref, ct_ref, cmem_ref,
                           wg_ref, bg_ref, wc_ref, bc_ref,
                           h_out_ref, c_out_ref):
    Hp = h_out_ref.shape[-1]

    # Fused gate matmul: [x, ht] @ [Wx; Wh]^T_fused + (bx + bh) -> (TB, 4*Hp).
    gates = jnp.dot(xh_ref[...], wg_ref[...],
                    preferred_element_type=jnp.float32) + bg_ref[...]

    # chunk(4, dim=1): [in_gate, forget_gate, new_memory, out_gate]
    in_gate     = jax.nn.sigmoid(gates[:, 0 * Hp:1 * Hp])
    forget_gate = jax.nn.sigmoid(gates[:, 1 * Hp:2 * Hp])
    new_memory  = jnp.tanh(gates[:, 2 * Hp:3 * Hp])
    out_gate    = jax.nn.sigmoid(gates[:, 3 * Hp:4 * Hp])

    ct = ct_ref[...].astype(jnp.float32)
    c_mem = cmem_ref[...].astype(jnp.float32)

    c_new = forget_gate * ct + in_gate * new_memory

    # Fused copy-gate matmul: [c_new, c_mem] @ [Wcn; Wcm] + (bcn + bcm).
    cc = jnp.concatenate([c_new, c_mem], axis=-1).astype(wc_ref.dtype)
    copy_gate = jax.nn.sigmoid(
        jnp.dot(cc, wc_ref[...], preferred_element_type=jnp.float32)
        + bc_ref[...])

    adaptive_memory = copy_gate * c_mem + (1.0 - copy_gate) * c_new
    h_new = out_gate * jnp.tanh(adaptive_memory)

    h_out_ref[...] = h_new.astype(h_out_ref.dtype)
    c_out_ref[...] = adaptive_memory.astype(c_out_ref.dtype)


def _prepare_weights(params, input_size, hidden_size, compute_dtype):
    """Fold the 4 Linear layers into 2 lane-padded fused (in, out) weights."""
    H, I = hidden_size, input_size
    Hp = _round_up(H, _LANE)
    Ip = _round_up(I, _LANE)

    # x2h / h2h are (4H, in) in PyTorch convention.  Pad each of the 4 gate
    # chunks to Hp (so gate slices stay 128-lane aligned), transpose to
    # (in, out), and stack along the contraction dim.
    wx = params["x2h_w"].reshape(4, H, I)
    wh = params["h2h_w"].reshape(4, H, H)
    wx = jnp.pad(wx, ((0, 0), (0, Hp - H), (0, Ip - I)))
    wh = jnp.pad(wh, ((0, 0), (0, Hp - H), (0, Hp - H)))
    wx_t = wx.transpose(2, 0, 1).reshape(Ip, 4 * Hp)
    wh_t = wh.transpose(2, 0, 1).reshape(Hp, 4 * Hp)
    w_gates = jnp.concatenate([wx_t, wh_t], axis=0).astype(compute_dtype)

    b = (params["x2h_b"] + params["h2h_b"]).reshape(4, H)
    b_gates = jnp.pad(b, ((0, 0), (0, Hp - H))).reshape(1, 4 * Hp)
    b_gates = b_gates.astype(jnp.float32)

    wcn = jnp.pad(params["gate_cnew_w"], ((0, Hp - H), (0, Hp - H)))
    wcm = jnp.pad(params["gate_cmem_w"], ((0, Hp - H), (0, Hp - H)))
    w_copy = jnp.concatenate([wcn.T, wcm.T], axis=0).astype(compute_dtype)
    b_copy = jnp.pad(params["gate_cnew_b"] + params["gate_cmem_b"],
                     (0, Hp - H)).reshape(1, Hp).astype(jnp.float32)

    return w_gates, b_gates, w_copy, b_copy, Ip, Hp


def copy_lstm_cell_forward(x, states, c_memory, params, *,
                           compute_dtype=jnp.bfloat16, batch_tile=256):
    """Pallas-backed CopyLSTMCellC.forward.

    x:         (B, input_size)
    states:    (ht, ct) each (B, hidden_size)
    c_memory:  (B, hidden_size)
    params:    dict of PyTorch-convention weights (out, in) and biases (out,)
    returns:   (h_new, adaptive_memory) each (B, hidden_size)
    """
    ht, ct = states
    B, I = x.shape
    H = ht.shape[-1]
    out_dtype = ht.dtype

    w_gates, b_gates, w_copy, b_copy, Ip, Hp = _prepare_weights(
        params, I, H, compute_dtype)

    # ---- batch tiling (multiple of 8 for f32 / 16 for bf16 operands) ------
    sub = 8 * (4 // jnp.dtype(compute_dtype).itemsize)
    tb = _round_up(min(batch_tile, _round_up(B, sub)), sub)
    Bp = _round_up(B, tb)
    n_tiles = Bp // tb
    K1 = Ip + Hp

    # ---- pad + fuse activations (pure XLA glue) ---------------------------
    xh = jnp.concatenate(
        [jnp.pad(x, ((0, Bp - B), (0, Ip - I))),
         jnp.pad(ht, ((0, Bp - B), (0, Hp - H)))],
        axis=-1).astype(compute_dtype)                       # (Bp, Ip + Hp)
    ct_p = jnp.pad(ct, ((0, Bp - B), (0, Hp - H))).astype(out_dtype)
    cm_p = jnp.pad(c_memory, ((0, Bp - B), (0, Hp - H))).astype(out_dtype)

    # ---- VMEM budget / cost hint ------------------------------------------
    wbytes = (w_gates.size * jnp.dtype(compute_dtype).itemsize
              + w_copy.size * jnp.dtype(compute_dtype).itemsize
              + (b_gates.size + b_copy.size) * 4)
    abytes = (tb * K1 * jnp.dtype(compute_dtype).itemsize
              + 4 * tb * Hp * jnp.dtype(out_dtype).itemsize)
    est = 2 * wbytes + 2 * abytes + 6 * tb * 4 * Hp * 4
    vmem_limit = int(min(max(est, 32 * 1024 * 1024), 56 * 1024 * 1024))

    cost = pl.CostEstimate(
        flops=int(2 * Bp * (K1 * 4 * Hp + 2 * Hp * Hp) + 10 * Bp * Hp),
        transcendentals=int(6 * Bp * Hp),
        bytes_accessed=int(wbytes
                           + Bp * K1 * jnp.dtype(compute_dtype).itemsize
                           + 4 * Bp * Hp * jnp.dtype(out_dtype).itemsize),
    )

    # NOTE: input_output_aliases intentionally omitted so eager callers keep
    # ownership of c_memory (padding usually copies anyway).
    h_p, c_p = pl.pallas_call(
        _copy_lstm_cell_kernel,
        grid=(n_tiles,),
        in_specs=[
            pl.BlockSpec((tb, K1), lambda i: (i, 0)),       # [x, ht] tile
            pl.BlockSpec((tb, Hp), lambda i: (i, 0)),       # ct tile
            pl.BlockSpec((tb, Hp), lambda i: (i, 0)),       # c_memory tile
            pl.BlockSpec((K1, 4 * Hp), lambda i: (0, 0)),   # fused gate W (resident)
            pl.BlockSpec((1, 4 * Hp), lambda i: (0, 0)),    # fused gate bias
            pl.BlockSpec((2 * Hp, Hp), lambda i: (0, 0)),   # fused copy W (resident)
            pl.BlockSpec((1, Hp), lambda i: (0, 0)),        # fused copy bias
        ],
        out_specs=(
            pl.BlockSpec((tb, Hp), lambda i: (i, 0)),
            pl.BlockSpec((tb, Hp), lambda i: (i, 0)),
        ),
        out_shape=(
            jax.ShapeDtypeStruct((Bp, Hp), out_dtype),
            jax.ShapeDtypeStruct((Bp, Hp), out_dtype),
        ),
        compiler_params=pltpu.CompilerParams(
            dimension_semantics=("parallel",),
            vmem_limit_bytes=vmem_limit,
        ),
        cost_estimate=cost,
    )(xh, ct_p, cm_p, w_gates, b_gates, w_copy, b_copy)

    return h_p[:B, :H], c_p[:B, :H]


def _reference_forward(x, states, c_memory, params):
    """Pure-JAX reference replicating the PyTorch module exactly."""
    ht, ct = states
    gates = x @ params["x2h_w"].T + params["x2h_b"] \
        + ht @ params["h2h_w"].T + params["h2h_b"]
    H = ht.shape[-1]
    in_g, f_g, new_m, out_g = (gates[:, i * H:(i + 1) * H] for i in range(4))
    in_g = jax.nn.sigmoid(in_g)
    f_g = jax.nn.sigmoid(f_g)
    out_g = jax.nn.sigmoid(out_g)
    new_m = jnp.tanh(new_m)
    c_new = f_g * ct + in_g * new_m
    copy_gate = jax.nn.sigmoid(
        c_new @ params["gate_cnew_w"].T + params["gate_cnew_b"]
        + c_memory @ params["gate_cmem_w"].T + params["gate_cmem_b"]
    )
    adaptive = copy_gate * c_memory + (1 - copy_gate) * c_new
    return out_g * jnp.tanh(adaptive), adaptive


def init_params(key, input_size, hidden_size, dtype=jnp.float32):
    """Deterministic uniform(-std, std) init, matching init_parameters()."""
    std = 1.0 / math.sqrt(hidden_size)
    keys = jax.random.split(key, 8)
    shapes = {
        "x2h_w": (4 * hidden_size, input_size),
        "x2h_b": (4 * hidden_size,),
        "h2h_w": (4 * hidden_size, hidden_size),
        "h2h_b": (4 * hidden_size,),
        "gate_cnew_w": (hidden_size, hidden_size),
        "gate_cnew_b": (hidden_size,),
        "gate_cmem_w": (hidden_size, hidden_size),
        "gate_cmem_b": (hidden_size,),
    }
    return {
        name: jax.random.uniform(k, shape, dtype, minval=-std, maxval=std)
        for (name, shape), k in zip(shapes.items(), keys)
    }


if __name__ == "__main__":
    B, INPUT, HIDDEN = 4, 16, 32
    key = jax.random.PRNGKey(0)
    k_p, k_x, k_h, k_c, k_m = jax.random.split(key, 5)

    params = init_params(k_p, INPUT, HIDDEN)
    x = jax.random.normal(k_x, (B, INPUT), jnp.float32)
    ht = jax.random.normal(k_h, (B, HIDDEN), jnp.float32)
    ct = jax.random.normal(k_c, (B, HIDDEN), jnp.float32)
    c_memory = jax.random.normal(k_m, (B, HIDDEN), jnp.float32)

    h_ref, c_ref = _reference_forward(x, (ht, ct), c_memory, params)

    # f32 matmul path: tight tolerance vs. reference.
    h_f32, c_f32 = copy_lstm_cell_forward(
        x, (ht, ct), c_memory, params, compute_dtype=jnp.float32)
    jax.block_until_ready((h_f32, c_f32))
    assert h_f32.shape == (B, HIDDEN) and c_f32.shape == (B, HIDDEN)
    assert jnp.allclose(h_f32, h_ref, atol=1e-5, rtol=1e-5)
    assert jnp.allclose(c_f32, c_ref, atol=1e-5, rtol=1e-5)

    # bf16 matmul operands + f32 accumulation (recommended on v6e/v7x MXU).
    h_bf, c_bf = copy_lstm_cell_forward(
        x, (ht, ct), c_memory, params, compute_dtype=jnp.bfloat16)
    jax.block_until_ready((h_bf, c_bf))
    assert jnp.allclose(h_bf, h_ref, atol=5e-2, rtol=5e-2)
    assert jnp.allclose(c_bf, c_ref, atol=5e-2, rtol=5e-2)

    print("KERNEL_OK")
</pallas_src>

<mosaic_0001>
module attributes {stable_mosaic.version = 11 : i64} {
  func.func @_copy_lstm_cell_kernel(%arg0: i32, %arg1: memref<8x256xf32, #tpu.memory_space<vmem>>, %arg2: memref<8x128xf32, #tpu.memory_space<vmem>>, %arg3: memref<8x128xf32, #tpu.memory_space<vmem>>, %arg4: memref<256x512xf32, #tpu.memory_space<vmem>>, %arg5: memref<1x512xf32, #tpu.memory_space<vmem>>, %arg6: memref<256x128xf32, #tpu.memory_space<vmem>>, %arg7: memref<1x128xf32, #tpu.memory_space<vmem>>, %arg8: memref<8x128xf32, #tpu.memory_space<vmem>>, %arg9: memref<8x128xf32, #tpu.memory_space<vmem>>) attributes {dimension_semantics = [#tpu.dimension_semantics<parallel>], iteration_bounds = array<i64: 1>, scalar_prefetch = 0 : i64, scratch_operands = 0 : i64, tpu.core_type = #tpu.core_type<tc>, window_params = [{transform_indices = @transform_0, window_bounds = array<i64: 8, 256>}, {transform_indices = @transform_1, window_bounds = array<i64: 8, 128>}, {transform_indices = @transform_2, window_bounds = array<i64: 8, 128>}, {pipeline_mode = #tpu.pipeline_mode<synchronous>, transform_indices = @transform_3, window_bounds = array<i64: 256, 512>}, {pipeline_mode = #tpu.pipeline_mode<synchronous>, transform_indices = @transform_4, window_bounds = array<i64: 1, 512>}, {pipeline_mode = #tpu.pipeline_mode<synchronous>, transform_indices = @transform_5, window_bounds = array<i64: 256, 128>}, {pipeline_mode = #tpu.pipeline_mode<synchronous>, transform_indices = @transform_6, window_bounds = array<i64: 1, 128>}, {transform_indices = @transform_7, window_bounds = array<i64: 8, 128>}, {transform_indices = @transform_8, window_bounds = array<i64: 8, 128>}]} {
    %c0 = arith.constant 0 : index
    %c0_0 = arith.constant 0 : index
    %0 = vector.load %arg1[%c0, %c0_0] : memref<8x256xf32, #tpu.memory_space<vmem>>, vector<8x256xf32>
    %c0_1 = arith.constant 0 : index
    %c0_2 = arith.constant 0 : index
    %1 = vector.load %arg4[%c0_1, %c0_2] : memref<256x512xf32, #tpu.memory_space<vmem>>, vector<256x512xf32>
    %cst = arith.constant dense<0.000000e+00> : vector<8x512xf32>
    %2 = tpu.matmul %0, %1, %cst {dimension_numbers = #tpu.dot_dimension_numbers<[1], [0], [0], [1], [0, 0, 1, 1], [], []>} : vector<8x256xf32>, vector<256x512xf32>, vector<8x512xf32> -> vector<8x512xf32>
    %c0_3 = arith.constant 0 : index
    %c0_4 = arith.constant 0 : index
    %3 = vector.load %arg5[%c0_3, %c0_4] : memref<1x512xf32, #tpu.memory_space<vmem>>, vector<1x512xf32>
    %4 = vector.broadcast %3 : vector<1x512xf32> to vector<8x512xf32>
    %5 = arith.addf %2, %4 : vector<8x512xf32>
    %6 = vector.extract_strided_slice %5 {offsets = [0, 0], sizes = [8, 128], strides = [1, 1]} : vector<8x512xf32> to vector<8x128xf32>
    %7 = arith.negf %6 : vector<8x128xf32>
    %8 = math.exp %7 : vector<8x128xf32>
    %cst_5 = arith.constant 1.000000e+00 : f32
    %9 = vector.broadcast %cst_5 : f32 to vector<8x128xf32>
    %10 = arith.addf %9, %8 : vector<8x128xf32>
    %11 = arith.divf %9, %10 : vector<8x128xf32>
    %12 = vector.extract_strided_slice %5 {offsets = [0, 128], sizes = [8, 128], strides = [1, 1]} : vector<8x512xf32> to vector<8x128xf32>
    %13 = arith.negf %12 : vector<8x128xf32>
    %14 = math.exp %13 : vector<8x128xf32>
    %cst_6 = arith.constant 1.000000e+00 : f32
    %15 = vector.broadcast %cst_6 : f32 to vector<8x128xf32>
    %16 = arith.addf %15, %14 : vector<8x128xf32>
    %17 = arith.divf %15, %16 : vector<8x128xf32>
    %18 = vector.extract_strided_slice %5 {offsets = [0, 256], sizes = [8, 128], strides = [1, 1]} : vector<8x512xf32> to vector<8x128xf32>
    %19 = math.tanh %18 : vector<8x128xf32>
    %20 = vector.extract_strided_slice %5 {offsets = [0, 384], sizes = [8, 128], strides = [1, 1]} : vector<8x512xf32> to vector<8x128xf32>
    %21 = arith.negf %20 : vector<8x128xf32>
    %22 = math.exp %21 : vector<8x128xf32>
    %cst_7 = arith.constant 1.000000e+00 : f32
    %23 = vector.broadcast %cst_7 : f32 to vector<8x128xf32>
    %24 = arith.addf %23, %22 : vector<8x128xf32>
    %25 = arith.divf %23, %24 : vector<8x128xf32>
    %c0_8 = arith.constant 0 : index
    %c0_9 = arith.constant 0 : index
    %26 = vector.load %arg2[%c0_8, %c0_9] : memref<8x128xf32, #tpu.memory_space<vmem>>, vector<8x128xf32>
    %c0_10 = arith.constant 0 : index
    %c0_11 = arith.constant 0 : index
    %27 = vector.load %arg3[%c0_10, %c0_11] : memref<8x128xf32, #tpu.memory_space<vmem>>, vector<8x128xf32>
    %28 = arith.mulf %17, %26 : vector<8x128xf32>
    %29 = arith.mulf %11, %19 : vector<8x128xf32>
    %30 = arith.addf %28, %29 : vector<8x128xf32>
    %31 = tpu.concatenate %30, %27 in 1 : vector<8x128xf32>, vector<8x128xf32> -> vector<8x256xf32>
    %c0_12 = arith.constant 0 : index
    %c0_13 = arith.constant 0 : index
    %32 = vector.load %arg6[%c0_12, %c0_13] : memref<256x128xf32, #tpu.memory_space<vmem>>, vector<256x128xf32>
    %cst_14 = arith.constant dense<0.000000e+00> : vector<8x128xf32>
    %33 = tpu.matmul %31, %32, %cst_14 {dimension_numbers = #tpu.dot_dimension_numbers<[1], [0], [0], [1], [0, 0, 1, 1], [], []>} : vector<8x256xf32>, vector<256x128xf32>, vector<8x128xf32> -> vector<8x128xf32>
    %c0_15 = arith.constant 0 : index
    %c0_16 = arith.constant 0 : index
    %34 = vector.load %arg7[%c0_15, %c0_16] : memref<1x128xf32, #tpu.memory_space<vmem>>, vector<1x128xf32>
    %35 = vector.broadcast %34 : vector<1x128xf32> to vector<8x128xf32>
    %36 = arith.addf %33, %35 : vector<8x128xf32>
    %37 = arith.negf %36 : vector<8x128xf32>
    %38 = math.exp %37 : vector<8x128xf32>
    %cst_17 = arith.constant 1.000000e+00 : f32
    %39 = vector.broadcast %cst_17 : f32 to vector<8x128xf32>
    %40 = arith.addf %39, %38 : vector<8x128xf32>
    %41 = arith.divf %39, %40 : vector<8x128xf32>
    %42 = arith.mulf %41, %27 : vector<8x128xf32>
    %cst_18 = arith.constant 1.000000e+00 : f32
    %43 = vector.broadcast %cst_18 : f32 to vector<8x128xf32>
    %44 = arith.subf %43, %41 : vector<8x128xf32>
    %45 = arith.mulf %44, %30 : vector<8x128xf32>
    %46 = arith.addf %42, %45 : vector<8x128xf32>
    %47 = math.tanh %46 : vector<8x128xf32>
    %48 = arith.mulf %25, %47 : vector<8x128xf32>
    %c0_19 = arith.constant 0 : index
    %c0_20 = arith.constant 0 : index
    %49 = vector.load %arg8[%c0_19, %c0_20] : memref<8x128xf32, #tpu.memory_space<vmem>>, vector<8x128xf32>
    tpu.vector_store %arg8[%c0_19, %c0_20], %48 {strides = array<i32>} : memref<8x128xf32, #tpu.memory_space<vmem>>, vector<8x128xf32>,
    %c0_21 = arith.constant 0 : index
    %c0_22 = arith.constant 0 : index
    %50 = vector.load %arg9[%c0_21, %c0_22] : memref<8x128xf32, #tpu.memory_space<vmem>>, vector<8x128xf32>
    tpu.vector_store %arg9[%c0_21, %c0_22], %46 {strides = array<i32>} : memref<8x128xf32, #tpu.memory_space<vmem>>, vector<8x128xf32>,
    return
  }
  func.func @transform_0(%arg0: i32) -> (i32, i32) {
    %c0_i32 = arith.constant 0 : i32
    %c0_i32_0 = arith.constant 0 : i32
    return %arg0, %c0_i32 : i32, i32
  }
  func.func @transform_1(%arg0: i32) -> (i32, i32) {
    %c0_i32 = arith.constant 0 : i32
    %c0_i32_0 = arith.constant 0 : i32
    return %arg0, %c0_i32 : i32, i32
  }
  func.func @transform_2(%arg0: i32) -> (i32, i32) {
    %c0_i32 = arith.constant 0 : i32
    %c0_i32_0 = arith.constant 0 : i32
    return %arg0, %c0_i32 : i32, i32
  }
  func.func @transform_3(%arg0: i32) -> (i32, i32) {
    %c0_i32 = arith.constant 0 : i32
    %c0_i32_0 = arith.constant 0 : i32
    %c0_i32_1 = arith.constant 0 : i32
    return %c0_i32, %c0_i32_0 : i32, i32
  }
  func.func @transform_4(%arg0: i32) -> (i32, i32) {
    %c0_i32 = arith.constant 0 : i32
    %c0_i32_0 = arith.constant 0 : i32
    %c0_i32_1 = arith.constant 0 : i32
    return %c0_i32, %c0_i32_0 : i32, i32
  }
  func.func @transform_5(%arg0: i32) -> (i32, i32) {
    %c0_i32 = arith.constant 0 : i32
    %c0_i32_0 = arith.constant 0 : i32
    %c0_i32_1 = arith.constant 0 : i32
    return %c0_i32, %c0_i32_0 : i32, i32
  }
  func.func @transform_6(%arg0: i32) -> (i32, i32) {
    %c0_i32 = arith.constant 0 : i32
    %c0_i32_0 = arith.constant 0 : i32
    %c0_i32_1 = arith.constant 0 : i32
    return %c0_i32, %c0_i32_0 : i32, i32
  }
  func.func @transform_7(%arg0: i32) -> (i32, i32) {
    %c0_i32 = arith.constant 0 : i32
    %c0_i32_0 = arith.constant 0 : i32
    return %arg0, %c0_i32 : i32, i32
  }
  func.func @transform_8(%arg0: i32) -> (i32, i32) {
    %c0_i32 = arith.constant 0 : i32
    %c0_i32_0 = arith.constant 0 : i32
    return %arg0, %c0_i32 : i32, i32
  }
}

</mosaic_0001>

<llo_original>
// kernel: tpu_custom_call.1
$region0: #{tpu_custom_call.1}
  #allocation0 [shape = 'u32[]', space=smem, size = 0x4, offset = 0x4, fixed_abs, tag = 'smem constant byte address 0x4 - core index']
  #allocation1 [shape = 'u32[144,128]{1,0:T(1,128)}', space=vmem, size = 0x12000, scoped, tag = 'internal scratch']
  %s0 = inlined_call_operand.hbm [shape: f32[8,256], index: 0, kind: input, shape index: {}]
  %s1 = inlined_call_operand.hbm [shape: f32[8,128], index: 1, kind: input, shape index: {}]
  %s2 = inlined_call_operand.hbm [shape: f32[8,128], index: 2, kind: input, shape index: {}]
  %s3 = inlined_call_operand.hbm [shape: f32[256,512], index: 3, kind: input, shape index: {}]
  %s4 = inlined_call_operand.vmem [shape: f32[1,512], index: 4, kind: input, shape index: {}]
  %s5 = inlined_call_operand.hbm [shape: f32[256,128], index: 5, kind: input, shape index: {}]
  %s6 = inlined_call_operand.vmem [shape: f32[1,128], index: 6, kind: input, shape index: {}]
  %s7 = inlined_call_operand.hbm [shape: f32[8,128], index: 7, kind: output, shape index: {0}]
  %s8 = inlined_call_operand.hbm [shape: f32[8,128], index: 8, kind: output, shape index: {1}]
  %9 = xla_tuple %s7, %s8
  %s10 = sld [smem:[#allocation0]]
  $region66: #{tpu_custom_call.1} parent=0
    _
  %s12 = ssub.s32 1, %s10
  %s13 = scalar_select 0, %s12, %s10
  $region1: #{tpu_custom_call.1} parent=0
    #allocation2 [shape = 'u8[8192]{0}', space=vmem, size = 0x2000, scoped, tag = 'input window, operand 0, single buffered']
    #allocation3 [shape = 's32[1]{0}', space=sflag, size = 0x4, scoped, tag = 'scoped memory for tpu_custom_call.1']
    #allocation4 [shape = 's32[1]{0}', space=sflag, size = 0x4, scoped, tag = 'scoped memory for tpu_custom_call.1']
    #allocation5 [shape = 'u8[4096]{0}', space=vmem, size = 0x1000, scoped, tag = 'input window, operand 1, single buffered']
    #allocation6 [shape = 's32[1]{0}', space=sflag, size = 0x4, scoped, tag = 'scoped memory for tpu_custom_call.1']
    #allocation7 [shape = 'u8[4096]{0}', space=vmem, size = 0x1000, scoped, tag = 'input window, operand 2, single buffered']
    #allocation8 [shape = 'u8[524288]{0}', space=vmem, size = 0x80000, scoped, tag = 'input window, operand 3, single buffered']
    #allocation9 [shape = 's32[1]{0}', space=sflag, size = 0x4, scoped, tag = 'scoped memory for tpu_custom_call.1']
    #allocation10 [shape = 'u8[131072]{0}', space=vmem, size = 0x20000, scoped, tag = 'input window, operand 5, single buffered']
    #allocation11 [shape = 'u8[4096]{0}', space=vmem, size = 0x1000, scoped, tag = 'output window, operand 0, single buffered']
    #allocation12 [shape = 'u8[4096]{0}', space=vmem, size = 0x1000, scoped, tag = 'output window, operand 1, single buffered']
    #allocation13 [shape = 's32[1]{0}', space=sflag, size = 0x4, scoped, tag = 'scoped memory for tpu_custom_call.1']
    %14 = vsyncpa [#allocation3], 0
    %15 = vsyncpa [#allocation6], 0
    %16 = vsyncpa [#allocation9], 0
    %17 = vsyncpa [#allocation4], 0
    %18 = vsyncpa [#allocation13], 0
    // Predicated region
    $region2: #{tpu_custom_call.1} parent=1 // pred_check
      _
    $region3: #{tpu_custom_call.1} parent=1 // pred_check_branch
      %20 = sbr.rel (0) target = $region5
    $region4: #{tpu_custom_call.1} parent=1 // pred_region
      %s22 = ssub.s32 256, 256
      %23 = vsyncadd [#allocation3], %s22
      %s25 = sshll.u32 [#allocation2], 4
      %s26 = int_to_ptr.vmem [resolvable:$true] %s25
      %28 = dma.hbm_to_vmem [thread:$0]  %s0, 256, %s26, [#allocation3]
    $region5: #{tpu_custom_call.1} parent=1 // pred_fallthru
      _
    // Predicated region
    $region6: #{tpu_custom_call.1} parent=1 // pred_check
      _
    $region7: #{tpu_custom_call.1} parent=1 // pred_check_branch
      %30 = sbr.rel (0) target = $region9
    $region8: #{tpu_custom_call.1} parent=1 // pred_region
      %s32 = ssub.s32 128, 128
      %33 = vsyncadd [#allocation6], %s32
      %s35 = sshll.u32 [#allocation5], 4
      %s36 = int_to_ptr.vmem [resolvable:$true] %s35
      %38 = dma.hbm_to_vmem [thread:$0]  %s1, 128, %s36, [#allocation6]
    $region9: #{tpu_custom_call.1} parent=1 // pred_fallthru
      _
    // Predicated region
    $region10: #{tpu_custom_call.1} parent=1 // pred_check
      _
    $region11: #{tpu_custom_call.1} parent=1 // pred_check_branch
      %40 = sbr.rel (0) target = $region13
    $region12: #{tpu_custom_call.1} parent=1 // pred_region
      %s42 = ssub.s32 128, 128
      %43 = vsyncadd [#allocation6], %s42
      %s45 = sshll.u32 [#allocation7], 4
      %s46 = int_to_ptr.vmem [resolvable:$true] %s45
      %48 = dma.hbm_to_vmem [thread:$0]  %s2, 128, %s46, [#allocation6]
    $region13: #{tpu_custom_call.1} parent=1 // pred_fallthru
      _
    // Predicated region
    $region14: #{tpu_custom_call.1} parent=1 // pred_check
      _
    $region15: #{tpu_custom_call.1} parent=1 // pred_check_branch
      %50 = sbr.rel (0) target = $region17
    $region16: #{tpu_custom_call.1} parent=1 // pred_region
      %s52 = ssub.s32 16384, 16384
      %53 = vsyncadd [#allocation9], %s52
      %s54 = sshll.u32 [#allocation8], 4
      %s55 = int_to_ptr.vmem [resolvable:$true] %s54
      %60 = dma.hbm_to_vmem [thread:$0]  %s3, 16384, %s55, [#allocation9], 512, 512, 32
    $region17: #{tpu_custom_call.1} parent=1 // pred_fallthru
      _
    // Predicated region
    $region18: #{tpu_custom_call.1} parent=1 // pred_check
      _
    $region19: #{tpu_custom_call.1} parent=1 // pred_check_branch
      %62 = sbr.rel (0) target = $region21
    $region20: #{tpu_custom_call.1} parent=1 // pred_region
      _
    $region21: #{tpu_custom_call.1} parent=1 // pred_fallthru
      _
    // Predicated region
    $region22: #{tpu_custom_call.1} parent=1 // pred_check
      _
    $region23: #{tpu_custom_call.1} parent=1 // pred_check_branch
      %64 = sbr.rel (0) target = $region25
    $region24: #{tpu_custom_call.1} parent=1 // pred_region
      %s66 = ssub.s32 4096, 4096
      %67 = vsyncadd [#allocation9], %s66
      %s68 = sshll.u32 [#allocation10], 4
      %s69 = int_to_ptr.vmem [resolvable:$true] %s68
      %74 = dma.hbm_to_vmem [thread:$0]  %s5, 4096, %s69, [#allocation9], 128, 128, 8
    $region25: #{tpu_custom_call.1} parent=1 // pred_fallthru
      _
    // Predicated region
    $region26: #{tpu_custom_call.1} parent=1 // pred_check
      _
    $region27: #{tpu_custom_call.1} parent=1 // pred_check_branch
      %76 = sbr.rel (0) target = $region29
    $region28: #{tpu_custom_call.1} parent=1 // pred_region
      _
    $region29: #{tpu_custom_call.1} parent=1 // pred_fallthru
      _
    // Predicated region
    $region30: #{tpu_custom_call.1} parent=1 // pred_check
      _
    $region31: #{tpu_custom_call.1} parent=1 // pred_check_branch
      %78 = sbr.rel (0) target = $region33
    $region32: #{tpu_custom_call.1} parent=1 // pred_region
      %79 = dma.done [#allocation3], 256
    $region33: #{tpu_custom_call.1} parent=1 // pred_fallthru
      _
    // Predicated region
    $region34: #{tpu_custom_call.1} parent=1 // pred_check
      _
    $region35: #{tpu_custom_call.1} parent=1 // pred_check_branch
      %81 = sbr.rel (0) target = $region37
    $region36: #{tpu_custom_call.1} parent=1 // pred_region
      %82 = dma.done [#allocation6], 128
    $region37: #{tpu_custom_call.1} parent=1 // pred_fallthru
      _
    // Predicated region
    $region38: #{tpu_custom_call.1} parent=1 // pred_check
      _
    $region39: #{tpu_custom_call.1} parent=1 // pred_check_branch
      %84 = sbr.rel (0) target = $region41
    $region40: #{tpu_custom_call.1} parent=1 // pred_region
      %85 = dma.done [#allocation6], 128
    $region41: #{tpu_custom_call.1} parent=1 // pred_fallthru
      _
    // Predicated region
    $region42: #{tpu_custom_call.1} parent=1 // pred_check
      _
    $region43: #{tpu_custom_call.1} parent=1 // pred_check_branch
      %87 = sbr.rel (0) target = $region45
    $region44: #{tpu_custom_call.1} parent=1 // pred_region
      %88 = dma.done [#allocation9], 16384
    $region45: #{tpu_custom_call.1} parent=1 // pred_fallthru
      _
    // Predicated region
    $region46: #{tpu_custom_call.1} parent=1 // pred_check
      _
    $region47: #{tpu_custom_call.1} parent=1 // pred_check_branch
      %90 = sbr.rel (0) target = $region49
    $region48: #{tpu_custom_call.1} parent=1 // pred_region
      %91 = dma.done [#allocation9], 4096
    $region49: #{tpu_custom_call.1} parent=1 // pred_fallthru
      _
    %v92 = vld [vmem:[#allocation2] sm:$0xff]
    %v93 = vld [vmem:[#allocation2 + $0x8] sm:$0xff]
    %v94 = vld [vmem:[#allocation8] sm:$0xff]
    %v95 = vld [vmem:[#allocation8 + $0x8] sm:$0xff]
    %v96 = vld [vmem:[#allocation8 + $0x10] sm:$0xff]
    %v97 = vld [vmem:[#allocation8 + $0x18] sm:$0xff]
    %v98 = vld [vmem:[#allocation8 + $0x20] sm:$0xff]
    %v99 = vld [vmem:[#allocation8 + $0x28] sm:$0xff]
    %v100 = vld [vmem:[#allocation8 + $0x30] sm:$0xff]
    %v101 = vld [vmem:[#allocation8 + $0x38] sm:$0xff]
    %v102 = vld [vmem:[#allocation8 + $0x40] sm:$0xff]
    %v103 = vld [vmem:[#allocation8 + $0x48] sm:$0xff]
    %v104 = vld [vmem:[#allocation8 + $0x50] sm:$0xff]
    %v105 = vld [vmem:[#allocation8 + $0x58] sm:$0xff]
    %v106 = vld [vmem:[#allocation8 + $0x60] sm:$0xff]
    %v107 = vld [vmem:[#allocation8 + $0x68] sm:$0xff]
    %v108 = vld [vmem:[#allocation8 + $0x70] sm:$0xff]
    %v109 = vld [vmem:[#allocation8 + $0x78] sm:$0xff]
    %v110 = vld [vmem:[#allocation8 + $0x80] sm:$0xff]
    %v111 = vld [vmem:[#allocation8 + $0x88] sm:$0xff]
    %v112 = vld [vmem:[#allocation8 + $0x90] sm:$0xff]
    %v113 = vld [vmem:[#allocation8 + $0x98] sm:$0xff]
    %v114 = vld [vmem:[#allocation8 + $0xa0] sm:$0xff]
    %v115 = vld [vmem:[#allocation8 + $0xa8] sm:$0xff]
    %v116 = vld [vmem:[#allocation8 + $0xb0] sm:$0xff]
    %v117 = vld [vmem:[#allocation8 + $0xb8] sm:$0xff]
    %v118 = vld [vmem:[#allocation8 + $0xc0] sm:$0xff]
    %v119 = vld [vmem:[#allocation8 + $0xc8] sm:$0xff]
    %v120 = vld [vmem:[#allocation8 + $0xd0] sm:$0xff]
    %v121 = vld [vmem:[#allocation8 + $0xd8] sm:$0xff]
    %v122 = vld [vmem:[#allocation8 + $0xe0] sm:$0xff]
    %v123 = vld [vmem:[#allocation8 + $0xe8] sm:$0xff]
    %v124 = vld [vmem:[#allocation8 + $0xf0] sm:$0xff]
    %v125 = vld [vmem:[#allocation8 + $0xf8] sm:$0xff]
    %v126 = vld [vmem:[#allocation8 + $0x100] sm:$0xff]
    %v127 = vld [vmem:[#allocation8 + $0x108] sm:$0xff]
    %v128 = vld [vmem:[#allocation8 + $0x110] sm:$0xff]
    %v129 = vld [vmem:[#allocation8 + $0x118] sm:$0xff]
    %v130 = vld [vmem:[#allocation8 + $0x120] sm:$0xff]
    %v131 = vld [vmem:[#allocation8 + $0x128] sm:$0xff]
    %v132 = vld [vmem:[#allocation8 + $0x130] sm:$0xff]
    %v133 = vld [vmem:[#allocation8 + $0x138] sm:$0xff]
    %v134 = vld [vmem:[#allocation8 + $0x140] sm:$0xff]
    %v135 = vld [vmem:[#allocation8 + $0x148] sm:$0xff]
    %v136 = vld [vmem:[#allocation8 + $0x150] sm:$0xff]
    %v137 = vld [vmem:[#allocation8 + $0x158] sm:$0xff]
    %v138 = vld [vmem:[#allocation8 + $0x160] sm:$0xff]
    %v139 = vld [vmem:[#allocation8 + $0x168] sm:$0xff]
    %v140 = vld [vmem:[#allocation8 + $0x170] sm:$0xff]
    %v141 = vld [vmem:[#allocation8 + $0x178] sm:$0xff]
    %v142 = vld [vmem:[#allocation8 + $0x180] sm:$0xff]
    %v143 = vld [vmem:[#allocation8 + $0x188] sm:$0xff]
    %v144 = vld [vmem:[#allocation8 + $0x190] sm:$0xff]
    %v145 = vld [vmem:[#allocation8 + $0x198] sm:$0xff]
    %v146 = vld [vmem:[#allocation8 + $0x1a0] sm:$0xff]
    %v147 = vld [vmem:[#allocation8 + $0x1a8] sm:$0xff]
    %v148 = vld [vmem:[#allocation8 + $0x1b0] sm:$0xff]
    %v149 = vld [vmem:[#allocation8 + $0x1b8] sm:$0xff]
    %v150 = vld [vmem:[#allocation8 + $0x1c0] sm:$0xff]
    %v151 = vld [vmem:[#allocation8 + $0x1c8] sm:$0xff]
    %v152 = vld [vmem:[#allocation8 + $0x1d0] sm:$0xff]
    %v153 = vld [vmem:[#allocation8 + $0x1d8] sm:$0xff]
    %v154 = vld [vmem:[#allocation8 + $0x1e0] sm:$0xff]
    %v155 = vld [vmem:[#allocation8 + $0x1e8] sm:$0xff]
    %v156 = vld [vmem:[#allocation8 + $0x1f0] sm:$0xff]
    %v157 = vld [vmem:[#allocation8 + $0x1f8] sm:$0xff]
    %v158 = vld [vmem:[#allocation8 + $0x200] sm:$0xff]
    %v159 = vld [vmem:[#allocation8 + $0x208] sm:$0xff]
    %v160 = vld [vmem:[#allocation8 + $0x210] sm:$0xff]
    %v161 = vld [vmem:[#allocation8 + $0x218] sm:$0xff]
    %v162 = vld [vmem:[#allocation8 + $0x220] sm:$0xff]
    %v163 = vld [vmem:[#allocation8 + $0x228] sm:$0xff]
    %v164 = vld [vmem:[#allocation8 + $0x230] sm:$0xff]
    %v165 = vld [vmem:[#allocation8 + $0x238] sm:$0xff]
    %v166 = vld [vmem:[#allocation8 + $0x240] sm:$0xff]
    %v167 = vld [vmem:[#allocation8 + $0x248] sm:$0xff]
    %v168 = vld [vmem:[#allocation8 + $0x250] sm:$0xff]
    %v169 = vld [vmem:[#allocation8 + $0x258] sm:$0xff]
    %v170 = vld [vmem:[#allocation8 + $0x260] sm:$0xff]
    %v171 = vld [vmem:[#allocation8 + $0x268] sm:$0xff]
    %v172 = vld [vmem:[#allocation8 + $0x270] sm:$0xff]
    %v173 = vld [vmem:[#allocation8 + $0x278] sm:$0xff]
    %v174 = vld [vmem:[#allocation8 + $0x280] sm:$0xff]
    %v175 = vld [vmem:[#allocation8 + $0x288] sm:$0xff]
    %v176 = vld [vmem:[#allocation8 + $0x290] sm:$0xff]
    %v177 = vld [vmem:[#allocation8 + $0x298] sm:$0xff]
    %v178 = vld [vmem:[#allocation8 + $0x2a0] sm:$0xff]
    %v179 = vld [vmem:[#allocation8 + $0x2a8] sm:$0xff]
    %v180 = vld [vmem:[#allocation8 + $0x2b0] sm:$0xff]
    %v181 = vld [vmem:[#allocation8 + $0x2b8] sm:$0xff]
    %v182 = vld [vmem:[#allocation8 + $0x2c0] sm:$0xff]
    %v183 = vld [vmem:[#allocation8 + $0x2c8] sm:$0xff]
    %v184 = vld [vmem:[#allocation8 + $0x2d0] sm:$0xff]
    %v185 = vld [vmem:[#allocation8 + $0x2d8] sm:$0xff]
    %v186 = vld [vmem:[#allocation8 + $0x2e0] sm:$0xff]
    %v187 = vld [vmem:[#allocation8 + $0x2e8] sm:$0xff]
    %v188 = vld [vmem:[#allocation8 + $0x2f0] sm:$0xff]
    %v189 = vld [vmem:[#allocation8 + $0x2f8] sm:$0xff]
    %v190 = vld [vmem:[#allocation8 + $0x300] sm:$0xff]
    %v191 = vld [vmem:[#allocation8 + $0x308] sm:$0xff]
    %v192 = vld [vmem:[#allocation8 + $0x310] sm:$0xff]
    %v193 = vld [vmem:[#allocation8 + $0x318] sm:$0xff]
    %v194 = vld [vmem:[#allocation8 + $0x320] sm:$0xff]
    %v195 = vld [vmem:[#allocation8 + $0x328] sm:$0xff]
    %v196 = vld [vmem:[#allocation8 + $0x330] sm:$0xff]
    %v197 = vld [vmem:[#allocation8 + $0x338] sm:$0xff]
    %v198 = vld [vmem:[#allocation8 + $0x340] sm:$0xff]
    %v199 = vld [vmem:[#allocation8 + $0x348] sm:$0xff]
    %v200 = vld [vmem:[#allocation8 + $0x350] sm:$0xff]
    %v201 = vld [vmem:[#allocation8 + $0x358] sm:$0xff]
    %v202 = vld [vmem:[#allocation8 + $0x360] sm:$0xff]
    %v203 = vld [vmem:[#allocation8 + $0x368] sm:$0xff]
    %v204 = vld [vmem:[#allocation8 + $0x370] sm:$0xff]
    %v205 = vld [vmem:[#allocation8 + $0x378] sm:$0xff]
    %v206 = vld [vmem:[#allocation8 + $0x380] sm:$0xff]
    %v207 = vld [vmem:[#allocation8 + $0x388] sm:$0xff]
    %v208 = vld [vmem:[#allocation8 + $0x390] sm:$0xff]
    %v209 = vld [vmem:[#allocation8 + $0x398] sm:$0xff]
    %v210 = vld [vmem:[#allocation8 + $0x3a0] sm:$0xff]
    %v211 = vld [vmem:[#allocation8 + $0x3a8] sm:$0xff]
    %v212 = vld [vmem:[#allocation8 + $0x3b0] sm:$0xff]
    %v213 = vld [vmem:[#allocation8 + $0x3b8] sm:$0xff]
    %v214 = vld [vmem:[#allocation8 + $0x3c0] sm:$0xff]
    %v215 = vld [vmem:[#allocation8 + $0x3c8] sm:$0xff]
    %v216 = vld [vmem:[#allocation8 + $0x3d0] sm:$0xff]
    %v217 = vld [vmem:[#allocation8 + $0x3d8] sm:$0xff]
    %v218 = vld [vmem:[#allocation8 + $0x3e0] sm:$0xff]
    %v219 = vld [vmem:[#allocation8 + $0x3e8] sm:$0xff]
    %v220 = vld [vmem:[#allocation8 + $0x3f0] sm:$0xff]
    %v221 = vld [vmem:[#allocation8 + $0x3f8] sm:$0xff]
    %v222 = vld [vmem:[%s4] sm:$0xf]
    %v224 = vlaneseq
    %v225 = vshrl.u32 %v224, 7
    %v226 = vsub.s32 0, %v225
    %v227 = vrot.slane %v222, %v226
    %v228 = vlaneseq
    %v229 = vshrl.u32 %v228, 7
    %v230 = vsub.s32 1, %v229
    %v231 = vrot.slane %v222, %v230
    %v232 = vlaneseq
    %v233 = vshrl.u32 %v232, 7
    %v234 = vsub.s32 2, %v233
    %v235 = vrot.slane %v222, %v234
    %v236 = vlaneseq
    %v237 = vshrl.u32 %v236, 7
    %v238 = vsub.s32 3, %v237
    %v239 = vrot.slane %v222, %v238
    %244 = vmatprep.subr.mxu0 %v95
    %245 = vmatpush1.msra.mxu0 %v94
    %246 = vmatprep.subr.mxu0 %v99
    %247 = vmatpush1.msra.mxu0 %v98
    %248 = vmatprep.subr.mxu0 %v103
    %249 = vmatpush1.msra.mxu0 %v102
    %250 = vmatprep.subr.mxu0 %v107
    %251 = vmatpush1.msra.mxu0 %v106
    %252 = vmatprep.subr.mxu0 %v111
    %253 = vmatpush1.msra.mxu0 %v110
    %254 = vmatprep.subr.mxu0 %v115
    %255 = vmatpush1.msra.mxu0 %v114
    %256 = vmatprep.subr.mxu0 %v119
    %257 = vmatpush1.msra.mxu0 %v118
    %258 = vmatprep.subr.mxu0 %v123
    %259 = vmatpush1.msra.mxu0 %v122
    %260 = vmatprep.subr.mxu0 %v127
    %261 = vmatpush1.msra.mxu0 %v126
    %262 = vmatprep.subr.mxu0 %v131
    %263 = vmatpush1.msra.mxu0 %v130
    %264 = vmatprep.subr.mxu0 %v135
    %265 = vmatpush1.msra.mxu0 %v134
    %266 = vmatprep.subr.mxu0 %v139
    %267 = vmatpush1.msra.mxu0 %v138
    %268 = vmatprep.subr.mxu0 %v143
    %269 = vmatpush1.msra.mxu0 %v142
    %270 = vmatprep.subr.mxu0 %v147
    %271 = vmatpush1.msra.mxu0 %v146
    %272 = vmatprep.subr.mxu0 %v151
    %273 = vmatpush1.msra.mxu0 %v150
    %274 = vmatprep.subr.mxu0 %v155
    %275 = vmatpush1.msra.mxu0 %v154
    %276 = vmatprep.subr.mxu0 %v159
    %277 = vmatpush1.msra.mxu0 %v158
    %278 = vmatprep.subr.mxu0 %v163
    %279 = vmatpush1.msra.mxu0 %v162
    %280 = vmatprep.subr.mxu0 %v167
    %281 = vmatpush1.msra.mxu0 %v166
    %282 = vmatprep.subr.mxu0 %v171
    %283 = vmatpush1.msra.mxu0 %v170
    %284 = vmatprep.subr.mxu0 %v175
    %285 = vmatpush1.msra.mxu0 %v174
    %286 = vmatprep.subr.mxu0 %v179
    %287 = vmatpush1.msra.mxu0 %v178
    %288 = vmatprep.subr.mxu0 %v183
    %289 = vmatpush1.msra.mxu0 %v182
    %290 = vmatprep.subr.mxu0 %v187
    %291 = vmatpush1.msra.mxu0 %v186
    %292 = vmatprep.subr.mxu0 %v191
    %293 = vmatpush1.msra.mxu0 %v190
    %294 = vmatprep.subr.mxu0 %v195
    %295 = vmatpush1.msra.mxu0 %v194
    %296 = vmatprep.subr.mxu0 %v199
    %297 = vmatpush1.msra.mxu0 %v198
    %298 = vmatprep.subr.mxu0 %v203
    %299 = vmatpush1.msra.mxu0 %v202
    %300 = vmatprep.subr.mxu0 %v207
    %301 = vmatpush1.msra.mxu0 %v206
    %302 = vmatprep.subr.mxu0 %v211
    %303 = vmatpush1.msra.mxu0 %v210
    %304 = vmatprep.subr.mxu0 %v215
    %305 = vmatpush1.msra.mxu0 %v214
    %306 = vmatprep.subr.mxu0 %v219
    %307 = vmatpush1.msra.mxu0 %v218
    %308 = vmatprep.mubr.f32.mxu0 %v93
    %309 = vmatmul.mubr.f32.gmra.mrb[0].mxu0 %v92
    %v310 = vpop.f32.mrb[0].mxu0
    %v311 = vadd.f32 %v227, %v310
    %v312 = vpop.f32.mrb[0].mxu0
    %v313 = vadd.f32 %v231, %v312
    %314 = vdwg.mxu0
    %315 = vmatprep.subr.mxu0 %v97
    %316 = vmatpush1.msra.mxu0 %v96
    %317 = vmatprep.subr.mxu0 %v101
    %318 = vmatpush1.msra.mxu0 %v100
    %319 = vmatprep.subr.mxu0 %v105
    %320 = vmatpush1.msra.mxu0 %v104
    %321 = vmatprep.subr.mxu0 %v109
    %322 = vmatpush1.msra.mxu0 %v108
    %323 = vmatprep.subr.mxu0 %v113
    %324 = vmatpush1.msra.mxu0 %v112
    %325 = vmatprep.subr.mxu0 %v117
    %326 = vmatpush1.msra.mxu0 %v116
    %327 = vmatprep.subr.mxu0 %v121
    %328 = vmatpush1.msra.mxu0 %v120
    %329 = vmatprep.subr.mxu0 %v125
    %330 = vmatpush1.msra.mxu0 %v124
    %331 = vmatprep.subr.mxu0 %v129
    %332 = vmatpush1.msra.mxu0 %v128
    %333 = vmatprep.subr.mxu0 %v133
    %334 = vmatpush1.msra.mxu0 %v132
    %335 = vmatprep.subr.mxu0 %v137
    %336 = vmatpush1.msra.mxu0 %v136
    %337 = vmatprep.subr.mxu0 %v141
    %338 = vmatpush1.msra.mxu0 %v140
    %339 = vmatprep.subr.mxu0 %v145
    %340 = vmatpush1.msra.mxu0 %v144
    %341 = vmatprep.subr.mxu0 %v149
    %342 = vmatpush1.msra.mxu0 %v148
    %343 = vmatprep.subr.mxu0 %v153
    %344 = vmatpush1.msra.mxu0 %v152
    %345 = vmatprep.subr.mxu0 %v157
    %346 = vmatpush1.msra.mxu0 %v156
    %347 = vmatprep.subr.mxu0 %v161
    %348 = vmatpush1.msra.mxu0 %v160
    %349 = vmatprep.subr.mxu0 %v165
    %350 = vmatpush1.msra.mxu0 %v164
    %351 = vmatprep.subr.mxu0 %v169
    %352 = vmatpush1.msra.mxu0 %v168
    %353 = vmatprep.subr.mxu0 %v173
    %354 = vmatpush1.msra.mxu0 %v172
    %355 = vmatprep.subr.mxu0 %v177
    %356 = vmatpush1.msra.mxu0 %v176
    %357 = vmatprep.subr.mxu0 %v181
    %358 = vmatpush1.msra.mxu0 %v180
    %359 = vmatprep.subr.mxu0 %v185
    %360 = vmatpush1.msra.mxu0 %v184
    %361 = vmatprep.subr.mxu0 %v189
    %362 = vmatpush1.msra.mxu0 %v188
    %363 = vmatprep.subr.mxu0 %v193
    %364 = vmatpush1.msra.mxu0 %v192
    %365 = vmatprep.subr.mxu0 %v197
    %366 = vmatpush1.msra.mxu0 %v196
    %367 = vmatprep.subr.mxu0 %v201
    %368 = vmatpush1.msra.mxu0 %v200
    %369 = vmatprep.subr.mxu0 %v205
    %370 = vmatpush1.msra.mxu0 %v204
    %371 = vmatprep.subr.mxu0 %v209
    %372 = vmatpush1.msra.mxu0 %v208
    %373 = vmatprep.subr.mxu0 %v213
    %374 = vmatpush1.msra.mxu0 %v212
    %375 = vmatprep.subr.mxu0 %v217
    %376 = vmatpush1.msra.mxu0 %v216
    %377 = vmatprep.subr.mxu0 %v221
    %378 = vmatpush1.msra.mxu0 %v220
    %379 = vmatprep.mubr.f32.mxu0 %v93
    %380 = vmatmul.mubr.f32.gmra.mrb[0].mxu0 %v92
    %v381 = vpop.f32.mrb[0].mxu0
    %v382 = vadd.f32 %v235, %v381
    %v383 = vpop.f32.mrb[0].mxu0
    %v384 = vadd.f32 %v239, %v383
    %385 = vdwg.mxu0
    %v386 = vxor.u32 %v311, 2147483648
    %v387 = vmul.f32 %v386, 1.442695
    %v388 = vpow.pop %v387
    %v389 = vadd.f32 %v388, 1.0
    %v390 = vrcp.pop %v389
    %v391 = vmul.f32 1.0, %v390
    %v392 = vxor.u32 %v313, 2147483648
    %v393 = vmul.f32 %v392, 1.442695
    %v394 = vpow.pop %v393
    %v395 = vadd.f32 %v394, 1.0
    %v396 = vrcp.pop %v395
    %v397 = vmul.f32 1.0, %v396
    %v398 = vtanh.pop %v382
    %v399 = vxor.u32 %v384, 2147483648
    %v400 = vmul.f32 %v399, 1.442695
    %v401 = vpow.pop %v400
    %v402 = vadd.f32 %v401, 1.0
    %v403 = vrcp.pop %v402
    %v404 = vmul.f32 1.0, %v403
    %v405 = vld [vmem:[#allocation5] sm:$0xff]
    %v406 = vld [vmem:[#allocation7] sm:$0xff]
    %v407 = vmul.f32 %v397, %v405
    %v408 = vmul.f32 %v391, %v398
    %v409 = vadd.f32 %v407, %v408
    %v410 = vld [vmem:[#allocation10] sm:$0xff]
    %v411 = vld [vmem:[#allocation10 + $0x8] sm:$0xff]
    %v412 = vld [vmem:[#allocation10 + $0x10] sm:$0xff]
    %v413 = vld [vmem:[#allocation10 + $0x18] sm:$0xff]
    %v414 = vld [vmem:[#allocation10 + $0x20] sm:$0xff]
    %v415 = vld [vmem:[#allocation10 + $0x28] sm:$0xff]
    %v416 = vld [vmem:[#allocation10 + $0x30] sm:$0xff]
    %v417 = vld [vmem:[#allocation10 + $0x38] sm:$0xff]
    %v418 = vld [vmem:[#allocation10 + $0x40] sm:$0xff]
    %v419 = vld [vmem:[#allocation10 + $0x48] sm:$0xff]
    %v420 = vld [vmem:[#allocation10 + $0x50] sm:$0xff]
    %v421 = vld [vmem:[#allocation10 + $0x58] sm:$0xff]
    %v422 = vld [vmem:[#allocation10 + $0x60] sm:$0xff]
    %v423 = vld [vmem:[#allocation10 + $0x68] sm:$0xff]
    %v424 = vld [vmem:[#allocation10 + $0x70] sm:$0xff]
    %v425 = vld [vmem:[#allocation10 + $0x78] sm:$0xff]
    %v426 = vld [vmem:[#allocation10 + $0x80] sm:$0xff]
    %v427 = vld [vmem:[#allocation10 + $0x88] sm:$0xff]
    %v428 = vld [vmem:[#allocation10 + $0x90] sm:$0xff]
    %v429 = vld [vmem:[#allocation10 + $0x98] sm:$0xff]
    %v430 = vld [vmem:[#allocation10 + $0xa0] sm:$0xff]
    %v431 = vld [vmem:[#allocation10 + $0xa8] sm:$0xff]
    %v432 = vld [vmem:[#allocation10 + $0xb0] sm:$0xff]
    %v433 = vld [vmem:[#allocation10 + $0xb8] sm:$0xff]
    %v434 = vld [vmem:[#allocation10 + $0xc0] sm:$0xff]
    %v435 = vld [vmem:[#allocation10 + $0xc8] sm:$0xff]
    %v436 = vld [vmem:[#allocation10 + $0xd0] sm:$0xff]
    %v437 = vld [vmem:[#allocation10 + $0xd8] sm:$0xff]
    %v438 = vld [vmem:[#allocation10 + $0xe0] sm:$0xff]
    %v439 = vld [vmem:[#allocation10 + $0xe8] sm:$0xff]
    %v440 = vld [vmem:[#allocation10 + $0xf0] sm:$0xff]
    %v441 = vld [vmem:[#allocation10 + $0xf8] sm:$0xff]
    %v442 = vld [vmem:[%s6] sm:$0x1]
    %v444 = vlaneseq
    %v445 = vshrl.u32 %v444, 7
    %v446 = vsub.s32 0, %v445
    %v447 = vrot.slane %v442, %v446
    %449 = vmatprep.subr.mxu0 0.0
    %450 = vmatpush1.msra.mxu0 %v410
    %451 = vmatprep.subr.mxu0 0.0
    %452 = vmatpush1.msra.mxu0 %v411
    %453 = vmatprep.subr.mxu0 0.0
    %454 = vmatpush1.msra.mxu0 %v412
    %455 = vmatprep.subr.mxu0 0.0
    %456 = vmatpush1.msra.mxu0 %v413
    %457 = vmatprep.subr.mxu0 0.0
    %458 = vmatpush1.msra.mxu0 %v414
    %459 = vmatprep.subr.mxu0 0.0
    %460 = vmatpush1.msra.mxu0 %v415
    %461 = vmatprep.subr.mxu0 0.0
    %462 = vmatpush1.msra.mxu0 %v416
    %463 = vmatprep.subr.mxu0 0.0
    %464 = vmatpush1.msra.mxu0 %v417
    %465 = vmatprep.subr.mxu0 0.0
    %466 = vmatpush1.msra.mxu0 %v418
    %467 = vmatprep.subr.mxu0 0.0
    %468 = vmatpush1.msra.mxu0 %v419
    %469 = vmatprep.subr.mxu0 0.0
    %470 = vmatpush1.msra.mxu0 %v420
    %471 = vmatprep.subr.mxu0 0.0
    %472 = vmatpush1.msra.mxu0 %v421
    %473 = vmatprep.subr.mxu0 0.0
    %474 = vmatpush1.msra.mxu0 %v422
    %475 = vmatprep.subr.mxu0 0.0
    %476 = vmatpush1.msra.mxu0 %v423
    %477 = vmatprep.subr.mxu0 0.0
    %478 = vmatpush1.msra.mxu0 %v424
    %479 = vmatprep.subr.mxu0 0.0
    %480 = vmatpush1.msra.mxu0 %v425
    %481 = vmatprep.subr.mxu0 0.0
    %482 = vmatpush1.msra.mxu0 %v426
    %483 = vmatprep.subr.mxu0 0.0
    %484 = vmatpush1.msra.mxu0 %v427
    %485 = vmatprep.subr.mxu0 0.0
    %486 = vmatpush1.msra.mxu0 %v428
    %487 = vmatprep.subr.mxu0 0.0
    %488 = vmatpush1.msra.mxu0 %v429
    %489 = vmatprep.subr.mxu0 0.0
    %490 = vmatpush1.msra.mxu0 %v430
    %491 = vmatprep.subr.mxu0 0.0
    %492 = vmatpush1.msra.mxu0 %v431
    %493 = vmatprep.subr.mxu0 0.0
    %494 = vmatpush1.msra.mxu0 %v432
    %495 = vmatprep.subr.mxu0 0.0
    %496 = vmatpush1.msra.mxu0 %v433
    %497 = vmatprep.subr.mxu0 0.0
    %498 = vmatpush1.msra.mxu0 %v434
    %499 = vmatprep.subr.mxu0 0.0
    %500 = vmatpush1.msra.mxu0 %v435
    %501 = vmatprep.subr.mxu0 0.0
    %502 = vmatpush1.msra.mxu0 %v436
    %503 = vmatprep.subr.mxu0 0.0
    %504 = vmatpush1.msra.mxu0 %v437
    %505 = vmatprep.subr.mxu0 0.0
    %506 = vmatpush1.msra.mxu0 %v438
    %507 = vmatprep.subr.mxu0 0.0
    %508 = vmatpush1.msra.mxu0 %v439
    %509 = vmatprep.subr.mxu0 0.0
    %510 = vmatpush1.msra.mxu0 %v440
    %511 = vmatprep.subr.mxu0 0.0
    %512 = vmatpush1.msra.mxu0 %v441
    %513 = vmatprep.mubr.f32.mxu0 %v406
    %514 = vmatmul.mubr.f32.gmra.mrb[0].mxu0 %v409
    %v515 = vpop.f32.mrb[0].mxu0
    %v516 = vadd.f32 %v447, %v515
    %v517 = vpop.f32.mrb[0].mxu0
    %518 = vdwg.mxu0
    %v519 = vxor.u32 %v516, 2147483648
    %v520 = vmul.f32 %v519, 1.442695
    %v521 = vpow.pop %v520
    %v522 = vadd.f32 %v521, 1.0
    %v523 = vrcp.pop %v522
    %v524 = vmul.f32 1.0, %v523
    %v525 = vmul.f32 %v524, %v406
    %v526 = vsub.f32 1.0, %v524
    %v527 = vmul.f32 %v526, %v409
    %v528 = vadd.f32 %v525, %v527
    %v529 = vtanh.pop %v528
    %v530 = vmul.f32 %v404, %v529
    %531 = vst [vmem:[#allocation11] sm:$0xff] %v530
    %532 = vst [vmem:[#allocation12] sm:$0xff] %v528
    // Predicated region
    $region50: #{tpu_custom_call.1} parent=1 // pred_check
      _
    $region51: #{tpu_custom_call.1} parent=1 // pred_check_branch
      %534 = sbr.rel (0) target = $region53
    $region52: #{tpu_custom_call.1} parent=1 // pred_region
      %s536 = ssub.s32 128, 128
      %537 = vsyncadd [#allocation4], %s536
      %s539 = sshll.u32 [#allocation11], 4
      %s540 = int_to_ptr.vmem [resolvable:$true] %s539
      %542 = dma.vmem_to_hbm [thread:$0]  %s540, 128, %s7, [#allocation4]
    $region53: #{tpu_custom_call.1} parent=1 // pred_fallthru
      _
    // Predicated region
    $region54: #{tpu_custom_call.1} parent=1 // pred_check
      _
    $region55: #{tpu_custom_call.1} parent=1 // pred_check_branch
      %544 = sbr.rel (0) target = $region57
    $region56: #{tpu_custom_call.1} parent=1 // pred_region
      %s546 = ssub.s32 128, 128
      %547 = vsyncadd [#allocation13], %s546
      %s549 = sshll.u32 [#allocation12], 4
      %s550 = int_to_ptr.vmem [resolvable:$true] %s549
      %552 = dma.vmem_to_hbm [thread:$0]  %s550, 128, %s8, [#allocation13]
    $region57: #{tpu_custom_call.1} parent=1 // pred_fallthru
      _
    // Predicated region
    $region58: #{tpu_custom_call.1} parent=1 // pred_check
      _
    $region59: #{tpu_custom_call.1} parent=1 // pred_check_branch
      %554 = sbr.rel (0) target = $region61
    $region60: #{tpu_custom_call.1} parent=1 // pred_region
      %555 = dma.done [#allocation4], 128
    $region61: #{tpu_custom_call.1} parent=1 // pred_fallthru
      _
    // Predicated region
    $region62: #{tpu_custom_call.1} parent=1 // pred_check
      _
    $region63: #{tpu_custom_call.1} parent=1 // pred_check_branch
      %557 = sbr.rel (0) target = $region65
    $region64: #{tpu_custom_call.1} parent=1 // pred_region
      %558 = dma.done [#allocation13], 128
    $region65: #{tpu_custom_call.1} parent=1 // pred_fallthru
      _
    %559 = vsyncpa [#allocation3], 1
    %560 = vsyncpa [#allocation6], 1
    %561 = vsyncpa [#allocation9], 1
    %562 = vsyncpa [#allocation4], 1
    %563 = vsyncpa [#allocation13], 1

</llo_original>
